<compile_context>
chip_gen: v7x
topology: tpu7x:2x2x1
jax: 0.10.0
libtpu: 0.0.40
codegen_flags: <defaults>
</compile_context>

<pallas_src>
import functools

import jax
import jax.numpy as jnp
from jax.experimental import pallas as pl
from jax.experimental.pallas import tpu as pltpu


def _concat_linear_kernel(x_ref, w_ref, b_ref, o_ref):
    # x_ref: (TM, H) f32   w_ref: (H, H) bf16|f32   b_ref: (1, H) f32
    # o_ref: (TM, 2H) f32
    x = x_ref[...]
    h = x.shape[-1]
    # MXU matmul with f32 accumulation; bias added in f32.
    y = jnp.dot(x.astype(w_ref.dtype), w_ref[...],
                preferred_element_type=jnp.float32)
    y = y + b_ref[...]
    # In-kernel concat: [ x | module(x) ] along the lane axis.
    o_ref[:, :h] = x.astype(o_ref.dtype)
    o_ref[:, h:] = y.astype(o_ref.dtype)


def _pick_tm(M: int, H: int, weight_bytes: int,
             vmem_budget: int = 40 << 20) -> int:
    """Row-tile size from a VMEM budget (conservative enough for v7x 64 MiB/TC).

    Per-row VMEM: double-buffered x (2*H*4) + double-buffered out (2*2H*4)
    = 24*H bytes/row; the weight is single-buffered (pl.Buffered(1)).
    """
    avail = max(vmem_budget - weight_bytes, 2 << 20)
    tm = avail // (24 * H)
    tm = max(128, min(tm, 2048))
    tm -= tm % 8                      # sublane alignment for partial-M blocks
    if tm >= M:
        return M                      # single grid step, full-extent block
    return tm


@functools.partial(jax.jit, static_argnames=("tm", "bf16_matmul"))
def concater_forward(x, w, b, *, tm=None, bf16_matmul: bool = True):
    """x: (B, S, H); w: (H, H) so y = x @ w + b (i.e. torch weight.T); b: (H,)."""
    B, S, H = x.shape
    M = B * S

    x2d = x.reshape(M, H)
    w_k = w.astype(jnp.bfloat16) if bf16_matmul else w.astype(jnp.float32)
    b2d = b.reshape(1, H).astype(jnp.float32)

    w_itemsize = jnp.dtype(w_k.dtype).itemsize
    weight_bytes = H * H * w_itemsize

    if tm is None:
        TM = _pick_tm(M, H, weight_bytes)
    else:
        TM = min(int(tm), M)
        if TM < M:
            TM = max(8, TM - TM % 8)

    grid = (pl.cdiv(M, TM),)

    # Real VMEM footprint: dbl-buffered x + out tiles, single-buffered w + b.
    footprint = (2 * TM * H * 4 + 2 * TM * 2 * H * 4
                 + weight_bytes + H * 4)
    vmem_limit = int(max(footprint + (4 << 20), 16 << 20))

    cost = pl.CostEstimate(
        flops=2 * M * H * H,
        transcendentals=0,
        bytes_accessed=(M * H * 4            # x in
                        + weight_bytes       # w in
                        + H * 4              # b in
                        + M * 2 * H * 4),    # out
    )

    out2d = pl.pallas_call(
        _concat_linear_kernel,
        out_shape=jax.ShapeDtypeStruct((M, 2 * H), x.dtype),
        grid_spec=pl.GridSpec(
            grid=grid,
            in_specs=[
                # x tile per row block (full-extent last dim -> no H padding).
                pl.BlockSpec((TM, H), lambda i: (i, 0)),
                # Weight: resident, single-buffered (constant index_map).
                pl.BlockSpec((H, H), lambda i: (0, 0),
                             pipeline_mode=pl.Buffered(1)),
                # Bias: resident, single-buffered.
                pl.BlockSpec((1, H), lambda i: (0, 0),
                             pipeline_mode=pl.Buffered(1)),
            ],
            out_specs=pl.BlockSpec((TM, 2 * H), lambda i: (i, 0)),
        ),
        compiler_params=pltpu.CompilerParams(
            dimension_semantics=("parallel",),   # megacore sharding on v7x
            vmem_limit_bytes=vmem_limit,
        ),
        cost_estimate=cost,
    )(x2d, w_k, b2d)

    return out2d.reshape(B, S, 2 * H)


if __name__ == "__main__":
    key = jax.random.PRNGKey(0)
    kx, kw, kb = jax.random.split(key, 3)

    # Small, lane-aligned demo shapes: batch=2, seq=8, hidden=128.
    B, S, H = 2, 8, 128
    x = jax.random.normal(kx, (B, S, H), dtype=jnp.float32)
    # PyTorch nn.Linear stores weight as (out, in); keep (in, out) so y = x @ w + b.
    w = (jax.random.normal(kw, (H, H), dtype=jnp.float32)
         * (1.0 / jnp.sqrt(jnp.float32(H))))
    b = jax.random.normal(kb, (H,), dtype=jnp.float32) * 0.01

    out = concater_forward(x, w, b)
    out = jax.block_until_ready(out)

    # Reference in plain JAX (f32).  Kernel matmul runs in bf16 with f32
    # accumulation (gated via bf16_matmul), so tolerance is loosened.
    ref = jnp.concatenate([x, jnp.einsum("bsh,hk->bsk", x, w) + b], axis=-1)
    assert out.shape == (B, S, 2 * H)
    # Pass-through half must be exact.
    assert jnp.array_equal(out[..., :H], x)
    # Linear half within bf16 matmul tolerance.
    assert jnp.allclose(out[..., H:], ref[..., H:], atol=3e-2, rtol=3e-2)

    print("KERNEL_OK")
</pallas_src>

<mosaic_0001>
module attributes {stable_mosaic.version = 11 : i64} {
  func.func @_concat_linear_kernel(%arg0: i32, %arg1: memref<16x128xf32, #tpu.memory_space<vmem>>, %arg2: memref<128x128xbf16, #tpu.memory_space<vmem>>, %arg3: memref<1x128xf32, #tpu.memory_space<vmem>>, %arg4: memref<16x256xf32, #tpu.memory_space<vmem>>) attributes {dimension_semantics = [#tpu.dimension_semantics<parallel>], iteration_bounds = array<i64: 1>, scalar_prefetch = 0 : i64, scratch_operands = 0 : i64, tpu.core_type = #tpu.core_type<tc>, window_params = [{transform_indices = @transform_0, window_bounds = array<i64: 16, 128>}, {pipeline_mode = #tpu.pipeline_mode<synchronous>, transform_indices = @transform_1, window_bounds = array<i64: 128, 128>}, {pipeline_mode = #tpu.pipeline_mode<synchronous>, transform_indices = @transform_2, window_bounds = array<i64: 1, 128>}, {transform_indices = @transform_3, window_bounds = array<i64: 16, 256>}]} {
    %c0 = arith.constant 0 : index
    %c0_0 = arith.constant 0 : index
    %0 = vector.load %arg1[%c0, %c0_0] : memref<16x128xf32, #tpu.memory_space<vmem>>, vector<16x128xf32>
    %1 = arith.truncf %0 : vector<16x128xf32> to vector<16x128xbf16>
    %c0_1 = arith.constant 0 : index
    %c0_2 = arith.constant 0 : index
    %2 = vector.load %arg2[%c0_1, %c0_2] : memref<128x128xbf16, #tpu.memory_space<vmem>>, vector<128x128xbf16>
    %cst = arith.constant dense<0.000000e+00> : vector<16x128xf32>
    %3 = tpu.matmul %1, %2, %cst {dimension_numbers = #tpu.dot_dimension_numbers<[1], [0], [0], [1], [0, 0, 1, 1], [], []>} : vector<16x128xbf16>, vector<128x128xbf16>, vector<16x128xf32> -> vector<16x128xf32>
    %c0_3 = arith.constant 0 : index
    %c0_4 = arith.constant 0 : index
    %4 = vector.load %arg3[%c0_3, %c0_4] : memref<1x128xf32, #tpu.memory_space<vmem>>, vector<1x128xf32>
    %5 = vector.broadcast %4 : vector<1x128xf32> to vector<16x128xf32>
    %6 = arith.addf %3, %5 : vector<16x128xf32>
    %c0_5 = arith.constant 0 : index
    %c0_6 = arith.constant 0 : index
    %7 = vector.load %arg4[%c0_5, %c0_6] : memref<16x256xf32, #tpu.memory_space<vmem>>, vector<16x128xf32>
    tpu.vector_store %arg4[%c0_5, %c0_6], %0 {strides = array<i32>} : memref<16x256xf32, #tpu.memory_space<vmem>>, vector<16x128xf32>,
    %c0_7 = arith.constant 0 : index
    %c128 = arith.constant 128 : index
    %8 = vector.load %arg4[%c0_7, %c128] : memref<16x256xf32, #tpu.memory_space<vmem>>, vector<16x128xf32>
    tpu.vector_store %arg4[%c0_7, %c128], %6 {strides = array<i32>} : memref<16x256xf32, #tpu.memory_space<vmem>>, vector<16x128xf32>,
    return
  }
  func.func @transform_0(%arg0: i32) -> (i32, i32) {
    %c0_i32 = arith.constant 0 : i32
    %c0_i32_0 = arith.constant 0 : i32
    return %arg0, %c0_i32 : i32, i32
  }
  func.func @transform_1(%arg0: i32) -> (i32, i32) {
    %c0_i32 = arith.constant 0 : i32
    %c0_i32_0 = arith.constant 0 : i32
    %c0_i32_1 = arith.constant 0 : i32
    return %c0_i32, %c0_i32_0 : i32, i32
  }
  func.func @transform_2(%arg0: i32) -> (i32, i32) {
    %c0_i32 = arith.constant 0 : i32
    %c0_i32_0 = arith.constant 0 : i32
    %c0_i32_1 = arith.constant 0 : i32
    return %c0_i32, %c0_i32_0 : i32, i32
  }
  func.func @transform_3(%arg0: i32) -> (i32, i32) {
    %c0_i32 = arith.constant 0 : i32
    %c0_i32_0 = arith.constant 0 : i32
    return %arg0, %c0_i32 : i32, i32
  }
}

</mosaic_0001>

<llo_original>
// kernel: concater_forward.1
$region0: #{concater_forward.1}
  #allocation0 [shape = 'u32[]', space=smem, size = 0x4, offset = 0x4, fixed_abs, tag = 'smem constant byte address 0x4 - core index']
  #allocation1 [shape = 'u32[144,128]{1,0:T(1,128)}', space=vmem, size = 0x12000, scoped, tag = 'internal scratch']
  %s0 = inlined_call_operand.vmem [shape: f32[16,128], index: 0, kind: input, shape index: {}]
  %s1 = inlined_call_operand.vmem [shape: bf16[128,128], index: 1, kind: input, shape index: {}]
  %s2 = inlined_call_operand.vmem [shape: f32[1,128], index: 2, kind: input, shape index: {}]
  %s3 = inlined_call_operand.hbm [shape: f32[16,256], index: 3, kind: output, shape index: {}]
  %s4 = sld [smem:[#allocation0]]
  $region22: #{concater_forward.1} parent=0
    _
  %s6 = ssub.s32 1, %s4
  %s7 = scalar_select 0, %s6, %s4
  $region1: #{concater_forward.1} parent=0
    #allocation2 [shape = 'u8[16384]{0}', space=vmem, size = 0x4000, scoped, tag = 'output window, operand 0, single buffered']
    #allocation3 [shape = 's32[1]{0}', space=sflag, size = 0x4, scoped, tag = 'scoped memory for concater_forward.1']
    %8 = vsyncpa [#allocation3], 0
    // Predicated region
    $region2: #{concater_forward.1} parent=1 // pred_check
      _
    $region3: #{concater_forward.1} parent=1 // pred_check_branch
      %10 = sbr.rel (0) target = $region5
    $region4: #{concater_forward.1} parent=1 // pred_region
      _
    $region5: #{concater_forward.1} parent=1 // pred_fallthru
      _
    // Predicated region
    $region6: #{concater_forward.1} parent=1 // pred_check
      _
    $region7: #{concater_forward.1} parent=1 // pred_check_branch
      %12 = sbr.rel (0) target = $region9
    $region8: #{concater_forward.1} parent=1 // pred_region
      _
    $region9: #{concater_forward.1} parent=1 // pred_fallthru
      _
    // Predicated region
    $region10: #{concater_forward.1} parent=1 // pred_check
      _
    $region11: #{concater_forward.1} parent=1 // pred_check_branch
      %14 = sbr.rel (0) target = $region13
    $region12: #{concater_forward.1} parent=1 // pred_region
      _
    $region13: #{concater_forward.1} parent=1 // pred_fallthru
      _
    %v16 = vld [vmem:[%s0] sm:$0xff]
    %v17 = vld [vmem:[%s0 + $0x8] sm:$0xff]
    %v18 = vpack.c.bf16 %v17, %v16
    %v19 = vld [vmem:[%s1] sm:$0xf]
    %v20 = vld [vmem:[%s1 + $0x4] sm:$0xf]
    %v21 = vld [vmem:[%s1 + $0x8] sm:$0xf]
    %v22 = vld [vmem:[%s1 + $0xc] sm:$0xf]
    %v23 = vld [vmem:[%s1 + $0x10] sm:$0xf]
    %v24 = vld [vmem:[%s1 + $0x14] sm:$0xf]
    %v25 = vld [vmem:[%s1 + $0x18] sm:$0xf]
    %v26 = vld [vmem:[%s1 + $0x1c] sm:$0xf]
    %v27 = vld [vmem:[%s1 + $0x20] sm:$0xf]
    %v28 = vld [vmem:[%s1 + $0x24] sm:$0xf]
    %v29 = vld [vmem:[%s1 + $0x28] sm:$0xf]
    %v30 = vld [vmem:[%s1 + $0x2c] sm:$0xf]
    %v31 = vld [vmem:[%s1 + $0x30] sm:$0xf]
    %v32 = vld [vmem:[%s1 + $0x34] sm:$0xf]
    %v33 = vld [vmem:[%s1 + $0x38] sm:$0xf]
    %v34 = vld [vmem:[%s1 + $0x3c] sm:$0xf]
    %v35 = vld [vmem:[%s2] sm:$0x1]
    %v37 = vlaneseq
    %v38 = vshrl.u32 %v37, 7
    %v39 = vsub.s32 0, %v38
    %v40 = vrot.slane %v35, %v39
    %v58 = vunpack.c.l.b16 %v19
    %v59 = vunpack.c.l.b16 %v20
    %v60 = vunpack.c.l.b16 %v21
    %v61 = vunpack.c.l.b16 %v22
    %v62 = vunpack.c.l.b16 %v23
    %v63 = vunpack.c.l.b16 %v24
    %v64 = vunpack.c.l.b16 %v25
    %v65 = vunpack.c.l.b16 %v26
    %v66 = vunpack.c.l.b16 %v27
    %v67 = vunpack.c.l.b16 %v28
    %v68 = vunpack.c.l.b16 %v29
    %v69 = vunpack.c.l.b16 %v30
    %v70 = vunpack.c.l.b16 %v31
    %v71 = vunpack.c.l.b16 %v32
    %v72 = vunpack.c.l.b16 %v33
    %v73 = vunpack.c.l.b16 %v34
    %v74 = vpack.c.b16 %v59, %v58
    %v75 = vpack.c.b16 %v61, %v60
    %v76 = vpack.c.b16 %v63, %v62
    %v77 = vpack.c.b16 %v65, %v64
    %v78 = vpack.c.b16 %v67, %v66
    %v79 = vpack.c.b16 %v69, %v68
    %v80 = vpack.c.b16 %v71, %v70
    %v81 = vpack.c.b16 %v73, %v72
    %90 = vmatprep.subr.bf16.mxu0 0
    %91 = vmatpush1.bf16.msra.mxu0 %v74
    %92 = vmatprep.subr.bf16.mxu0 0
    %93 = vmatpush1.bf16.msra.mxu0 %v75
    %94 = vmatprep.subr.bf16.mxu0 0
    %95 = vmatpush1.bf16.msra.mxu0 %v76
    %96 = vmatprep.subr.bf16.mxu0 0
    %97 = vmatpush1.bf16.msra.mxu0 %v77
    %98 = vmatprep.subr.bf16.mxu0 0
    %99 = vmatpush1.bf16.msra.mxu0 %v78
    %100 = vmatprep.subr.bf16.mxu0 0
    %101 = vmatpush1.bf16.msra.mxu0 %v79
    %102 = vmatprep.subr.bf16.mxu0 0
    %103 = vmatpush1.bf16.msra.mxu0 %v80
    %104 = vmatprep.subr.bf16.mxu0 0
    %105 = vmatpush1.bf16.msra.mxu0 %v81
    %106 = vmatprep.subr.bf16.mxu0 0
    %107 = vmatpush1.bf16.msra.mxu0 0
    %108 = vmatprep.subr.bf16.mxu0 0
    %109 = vmatpush1.bf16.msra.mxu0 0
    %110 = vmatprep.subr.bf16.mxu0 0
    %111 = vmatpush1.bf16.msra.mxu0 0
    %112 = vmatprep.subr.bf16.mxu0 0
    %113 = vmatpush1.bf16.msra.mxu0 0
    %114 = vmatprep.subr.bf16.mxu0 0
    %115 = vmatpush1.bf16.msra.mxu0 0
    %116 = vmatprep.subr.bf16.mxu0 0
    %117 = vmatpush1.bf16.msra.mxu0 0
    %118 = vmatprep.subr.bf16.mxu0 0
    %119 = vmatpush1.bf16.msra.mxu0 0
    %120 = vmatprep.subr.bf16.mxu0 0
    %121 = vmatpush1.bf16.msra.mxu0 0
    %122 = vmatprep.mubr.bf16.mxu0 0
    %123 = vmatmul.mubr.bf16.gmra.mrb[0].mxu0 %v18
    %v124 = vpop.f32.mrb[0].mxu0
    %v125 = vadd.f32 %v40, %v124
    %v126 = vpop.f32.mrb[0].mxu0
    %v127 = vpop.f32.mrb[0].mxu0
    %v128 = vadd.f32 %v40, %v127
    %v129 = vpop.f32.mrb[0].mxu0
    %130 = vdwg.mxu0
    %131 = vst [vmem:[#allocation2] sm:$0xff] %v16
    %132 = vst [vmem:[#allocation2 + $0x10] sm:$0xff] %v17
    %133 = vst [vmem:[#allocation2 + $0x8] sm:$0xff] %v125
    %134 = vst [vmem:[#allocation2 + $0x18] sm:$0xff] %v128
    // Predicated region
    $region14: #{concater_forward.1} parent=1 // pred_check
      _
    $region15: #{concater_forward.1} parent=1 // pred_check_branch
      %136 = sbr.rel (0) target = $region17
    $region16: #{concater_forward.1} parent=1 // pred_region
      %s138 = ssub.s32 512, 512
      %139 = vsyncadd [#allocation3], %s138
      %s140 = sshll.u32 [#allocation2], 4
      %s141 = int_to_ptr.vmem [resolvable:$true] %s140
      %146 = dma.vmem_to_hbm [thread:$0]  %s141, 512, %s3, [#allocation3], 256, 256, 16
    $region17: #{concater_forward.1} parent=1 // pred_fallthru
      _
    // Predicated region
    $region18: #{concater_forward.1} parent=1 // pred_check
      _
    $region19: #{concater_forward.1} parent=1 // pred_check_branch
      %148 = sbr.rel (0) target = $region21
    $region20: #{concater_forward.1} parent=1 // pred_region
      %149 = dma.done [#allocation3], 512
    $region21: #{concater_forward.1} parent=1 // pred_fallthru
      _
    %150 = vsyncpa [#allocation3], 1

</llo_original>
